<compile_context>
chip_gen: v5e
topology: v5e:2x2
jax: 0.10.0
libtpu: 0.0.40
codegen_flags: <defaults>
</compile_context>

<pallas_src>
import functools

import jax
import jax.numpy as jnp
from jax.experimental import pallas as pl
from jax.experimental.pallas import tpu as pltpu

_FEATURES = 6           # Linear(6 -> 1)
_LANE = 128             # TPU lane width
_DEFAULT_TILE = 16384   # lanes per grid step


def _round_up(x, m):
    return ((x + m - 1) // m) * m


def _cell_kernel(w_ref, b_ref, xin_ref, xh_ref, oin_ref, oh_ref):
    """One lane tile: y = relu(sum_k w[k]*x[k,:] + b) for both sources.

    w_ref: SMEM (6,) f32        b_ref: SMEM (1,) f32
    xin_ref/xh_ref: VMEM (6, TILE) f32
    oin_ref/oh_ref: VMEM (1, TILE) f32
    """
    bias = b_ref[0]

    def affine_relu(x_ref, o_ref):
        # Unrolled 6-term weighted sum: 6 scalar-broadcast muls + 5 adds per
        # vreg on the VPU; no cross-sublane reduction needed.
        acc = x_ref[0:1, :] * w_ref[0]
        for k in range(1, _FEATURES):
            acc = acc + x_ref[k:k + 1, :] * w_ref[k]
        o_ref[...] = jnp.maximum(acc + bias, 0.0)

    affine_relu(xin_ref, oin_ref)
    affine_relu(xh_ref, oh_ref)


@functools.partial(jax.jit, static_argnames=("tile", "use_pallas"))
def model_rnncell_forward(inp, hidden, weight, bias, *, tile=_DEFAULT_TILE,
                          use_pallas=None):
    """inp: (B_in, 6), hidden: (B_h, 6) -> (B_in + B_h, 1) float32."""
    inp = jnp.asarray(inp, jnp.float32)
    hidden = jnp.asarray(hidden, jnp.float32)
    w = jnp.asarray(weight, jnp.float32).reshape(_FEATURES)
    b = jnp.asarray(bias, jnp.float32).reshape(1)

    assert inp.shape[1] == _FEATURES and hidden.shape[1] == _FEATURES
    b_in, b_h = inp.shape[0], hidden.shape[0]

    if use_pallas is None:
        # A pallas_call has fixed launch / DMA-setup cost; for tiny batches a
        # single fused XLA elementwise is strictly faster.
        use_pallas = (b_in + b_h) >= 1024
    if not use_pallas:
        x = jnp.concatenate([inp, hidden], axis=0)
        return jnp.maximum(x @ w[:, None] + b, 0.0)

    # ---- wrapper-side layout plumbing: batch -> lanes, zero-pad to tiles.
    n_pad = max(b_in, b_h)
    tile = min(tile, _round_up(n_pad, _LANE))
    n_pad = _round_up(n_pad, tile)

    def to_lane_major(a):                      # (B, 6) -> (6, n_pad)
        return jnp.pad(a.T, ((0, 0), (0, n_pad - a.shape[0])))

    xin_t = to_lane_major(inp)
    xh_t = to_lane_major(hidden)

    x_spec = pl.BlockSpec((_FEATURES, tile), lambda i: (0, i))
    o_spec = pl.BlockSpec((1, tile), lambda i: (0, i))
    smem_spec = pl.BlockSpec(memory_space=pltpu.MemorySpace.SMEM)

    o_in, o_h = pl.pallas_call(
        _cell_kernel,
        out_shape=(jax.ShapeDtypeStruct((1, n_pad), jnp.float32),
                   jax.ShapeDtypeStruct((1, n_pad), jnp.float32)),
        grid=(n_pad // tile,),
        in_specs=[smem_spec, smem_spec, x_spec, x_spec],
        out_specs=(o_spec, o_spec),
        compiler_params=pltpu.CompilerParams(
            dimension_semantics=("parallel",)),
    )(w, b, xin_t, xh_t)

    # Fused concat: `input` and `hidden` results were produced separately;
    # gluing the small 1-D outputs reproduces torch.cat(..., dim=0).
    return jnp.concatenate([o_in[0, :b_in], o_h[0, :b_h]])[:, None]


if __name__ == "__main__":
    # Deterministic parameters (exactly as the module's __init__ sets them).
    weight = jnp.array([[1.0, 0.0, 0.0, 0.0, 0.0, 1.0]], dtype=jnp.float32)
    bias = jnp.array([0.0], dtype=jnp.float32)

    key = jax.random.PRNGKey(0)
    k1, k2, k3, k4 = jax.random.split(key, 4)

    def reference(inp, hid):
        x = jnp.concatenate([inp, hid], axis=0)
        return jnp.maximum(x @ weight.T + bias, 0.0)

    # Small shapes matching the module (batch=2 per source, features=6),
    # forced through the Pallas path so the kernel itself is exercised.
    inp_s = jax.random.normal(k1, (2, _FEATURES), dtype=jnp.float32)
    hid_s = jax.random.normal(k2, (2, _FEATURES), dtype=jnp.float32)
    out_s = jax.block_until_ready(
        model_rnncell_forward(inp_s, hid_s, weight, bias, use_pallas=True))
    assert out_s.shape == (4, 1)
    assert jnp.allclose(out_s, reference(inp_s, hid_s), atol=1e-6)

    # Larger batch: exercises the lane-tiled grid / DMA pipelining (4 steps).
    inp_l = jax.random.normal(k3, (2048, _FEATURES), dtype=jnp.float32)
    hid_l = jax.random.normal(k4, (2048, _FEATURES), dtype=jnp.float32)
    out_l = jax.block_until_ready(
        model_rnncell_forward(inp_l, hid_l, weight, bias, tile=512,
                              use_pallas=True))
    assert out_l.shape == (4096, 1)
    assert jnp.allclose(out_l, reference(inp_l, hid_l), atol=1e-6)

    print("KERNEL_OK")
</pallas_src>

<mosaic_0001>
module attributes {stable_mosaic.version = 11 : i64} {
  func.func @_cell_kernel(%arg0: i32, %arg1: memref<6xf32, #tpu.memory_space<smem>>, %arg2: memref<1xf32, #tpu.memory_space<smem>>, %arg3: memref<6x128xf32, #tpu.memory_space<vmem>>, %arg4: memref<6x128xf32, #tpu.memory_space<vmem>>, %arg5: memref<1x128xf32, #tpu.memory_space<vmem>>, %arg6: memref<1x128xf32, #tpu.memory_space<vmem>>) attributes {dimension_semantics = [#tpu.dimension_semantics<parallel>], iteration_bounds = array<i64: 1>, scalar_prefetch = 0 : i64, scratch_operands = 0 : i64, tpu.core_type = #tpu.core_type<tc>, window_params = [{transform_indices = @transform_0, window_bounds = array<i64: 6>}, {transform_indices = @transform_1, window_bounds = array<i64: 1>}, {transform_indices = @transform_2, window_bounds = array<i64: 6, 128>}, {transform_indices = @transform_3, window_bounds = array<i64: 6, 128>}, {transform_indices = @transform_4, window_bounds = array<i64: 1, 128>}, {transform_indices = @transform_5, window_bounds = array<i64: 1, 128>}]} {
    %c0 = arith.constant 0 : index
    %0 = memref.load %arg2[%c0] : memref<1xf32, #tpu.memory_space<smem>>
    %c0_0 = arith.constant 0 : index
    %c0_1 = arith.constant 0 : index
    %1 = vector.load %arg3[%c0_0, %c0_1] : memref<6x128xf32, #tpu.memory_space<vmem>>, vector<1x128xf32>
    %c0_2 = arith.constant 0 : index
    %2 = memref.load %arg1[%c0_2] : memref<6xf32, #tpu.memory_space<smem>>
    %3 = vector.broadcast %2 : f32 to vector<1x128xf32>
    %4 = arith.mulf %1, %3 : vector<1x128xf32>
    %c1 = arith.constant 1 : index
    %c0_3 = arith.constant 0 : index
    %5 = vector.load %arg3[%c1, %c0_3] : memref<6x128xf32, #tpu.memory_space<vmem>>, vector<1x128xf32>
    %c1_4 = arith.constant 1 : index
    %6 = memref.load %arg1[%c1_4] : memref<6xf32, #tpu.memory_space<smem>>
    %7 = vector.broadcast %6 : f32 to vector<1x128xf32>
    %8 = arith.mulf %5, %7 : vector<1x128xf32>
    %9 = arith.addf %4, %8 : vector<1x128xf32>
    %c2 = arith.constant 2 : index
    %c0_5 = arith.constant 0 : index
    %10 = vector.load %arg3[%c2, %c0_5] : memref<6x128xf32, #tpu.memory_space<vmem>>, vector<1x128xf32>
    %c2_6 = arith.constant 2 : index
    %11 = memref.load %arg1[%c2_6] : memref<6xf32, #tpu.memory_space<smem>>
    %12 = vector.broadcast %11 : f32 to vector<1x128xf32>
    %13 = arith.mulf %10, %12 : vector<1x128xf32>
    %14 = arith.addf %9, %13 : vector<1x128xf32>
    %c3 = arith.constant 3 : index
    %c0_7 = arith.constant 0 : index
    %15 = vector.load %arg3[%c3, %c0_7] : memref<6x128xf32, #tpu.memory_space<vmem>>, vector<1x128xf32>
    %c3_8 = arith.constant 3 : index
    %16 = memref.load %arg1[%c3_8] : memref<6xf32, #tpu.memory_space<smem>>
    %17 = vector.broadcast %16 : f32 to vector<1x128xf32>
    %18 = arith.mulf %15, %17 : vector<1x128xf32>
    %19 = arith.addf %14, %18 : vector<1x128xf32>
    %c4 = arith.constant 4 : index
    %c0_9 = arith.constant 0 : index
    %20 = vector.load %arg3[%c4, %c0_9] : memref<6x128xf32, #tpu.memory_space<vmem>>, vector<1x128xf32>
    %c4_10 = arith.constant 4 : index
    %21 = memref.load %arg1[%c4_10] : memref<6xf32, #tpu.memory_space<smem>>
    %22 = vector.broadcast %21 : f32 to vector<1x128xf32>
    %23 = arith.mulf %20, %22 : vector<1x128xf32>
    %24 = arith.addf %19, %23 : vector<1x128xf32>
    %c5 = arith.constant 5 : index
    %c0_11 = arith.constant 0 : index
    %25 = vector.load %arg3[%c5, %c0_11] : memref<6x128xf32, #tpu.memory_space<vmem>>, vector<1x128xf32>
    %c5_12 = arith.constant 5 : index
    %26 = memref.load %arg1[%c5_12] : memref<6xf32, #tpu.memory_space<smem>>
    %27 = vector.broadcast %26 : f32 to vector<1x128xf32>
    %28 = arith.mulf %25, %27 : vector<1x128xf32>
    %29 = arith.addf %24, %28 : vector<1x128xf32>
    %30 = vector.broadcast %0 : f32 to vector<1x128xf32>
    %31 = arith.addf %29, %30 : vector<1x128xf32>
    %cst = arith.constant 0.000000e+00 : f32
    %32 = vector.broadcast %cst : f32 to vector<1x128xf32>
    %33 = arith.maximumf %31, %32 : vector<1x128xf32>
    %c0_13 = arith.constant 0 : index
    %c0_14 = arith.constant 0 : index
    %34 = vector.load %arg5[%c0_13, %c0_14] : memref<1x128xf32, #tpu.memory_space<vmem>>, vector<1x128xf32>
    tpu.vector_store %arg5[%c0_13, %c0_14], %33 {strides = array<i32>} : memref<1x128xf32, #tpu.memory_space<vmem>>, vector<1x128xf32>,
    %c0_15 = arith.constant 0 : index
    %c0_16 = arith.constant 0 : index
    %35 = vector.load %arg4[%c0_15, %c0_16] : memref<6x128xf32, #tpu.memory_space<vmem>>, vector<1x128xf32>
    %c0_17 = arith.constant 0 : index
    %36 = memref.load %arg1[%c0_17] : memref<6xf32, #tpu.memory_space<smem>>
    %37 = vector.broadcast %36 : f32 to vector<1x128xf32>
    %38 = arith.mulf %35, %37 : vector<1x128xf32>
    %c1_18 = arith.constant 1 : index
    %c0_19 = arith.constant 0 : index
    %39 = vector.load %arg4[%c1_18, %c0_19] : memref<6x128xf32, #tpu.memory_space<vmem>>, vector<1x128xf32>
    %c1_20 = arith.constant 1 : index
    %40 = memref.load %arg1[%c1_20] : memref<6xf32, #tpu.memory_space<smem>>
    %41 = vector.broadcast %40 : f32 to vector<1x128xf32>
    %42 = arith.mulf %39, %41 : vector<1x128xf32>
    %43 = arith.addf %38, %42 : vector<1x128xf32>
    %c2_21 = arith.constant 2 : index
    %c0_22 = arith.constant 0 : index
    %44 = vector.load %arg4[%c2_21, %c0_22] : memref<6x128xf32, #tpu.memory_space<vmem>>, vector<1x128xf32>
    %c2_23 = arith.constant 2 : index
    %45 = memref.load %arg1[%c2_23] : memref<6xf32, #tpu.memory_space<smem>>
    %46 = vector.broadcast %45 : f32 to vector<1x128xf32>
    %47 = arith.mulf %44, %46 : vector<1x128xf32>
    %48 = arith.addf %43, %47 : vector<1x128xf32>
    %c3_24 = arith.constant 3 : index
    %c0_25 = arith.constant 0 : index
    %49 = vector.load %arg4[%c3_24, %c0_25] : memref<6x128xf32, #tpu.memory_space<vmem>>, vector<1x128xf32>
    %c3_26 = arith.constant 3 : index
    %50 = memref.load %arg1[%c3_26] : memref<6xf32, #tpu.memory_space<smem>>
    %51 = vector.broadcast %50 : f32 to vector<1x128xf32>
    %52 = arith.mulf %49, %51 : vector<1x128xf32>
    %53 = arith.addf %48, %52 : vector<1x128xf32>
    %c4_27 = arith.constant 4 : index
    %c0_28 = arith.constant 0 : index
    %54 = vector.load %arg4[%c4_27, %c0_28] : memref<6x128xf32, #tpu.memory_space<vmem>>, vector<1x128xf32>
    %c4_29 = arith.constant 4 : index
    %55 = memref.load %arg1[%c4_29] : memref<6xf32, #tpu.memory_space<smem>>
    %56 = vector.broadcast %55 : f32 to vector<1x128xf32>
    %57 = arith.mulf %54, %56 : vector<1x128xf32>
    %58 = arith.addf %53, %57 : vector<1x128xf32>
    %c5_30 = arith.constant 5 : index
    %c0_31 = arith.constant 0 : index
    %59 = vector.load %arg4[%c5_30, %c0_31] : memref<6x128xf32, #tpu.memory_space<vmem>>, vector<1x128xf32>
    %c5_32 = arith.constant 5 : index
    %60 = memref.load %arg1[%c5_32] : memref<6xf32, #tpu.memory_space<smem>>
    %61 = vector.broadcast %60 : f32 to vector<1x128xf32>
    %62 = arith.mulf %59, %61 : vector<1x128xf32>
    %63 = arith.addf %58, %62 : vector<1x128xf32>
    %64 = vector.broadcast %0 : f32 to vector<1x128xf32>
    %65 = arith.addf %63, %64 : vector<1x128xf32>
    %cst_33 = arith.constant 0.000000e+00 : f32
    %66 = vector.broadcast %cst_33 : f32 to vector<1x128xf32>
    %67 = arith.maximumf %65, %66 : vector<1x128xf32>
    %c0_34 = arith.constant 0 : index
    %c0_35 = arith.constant 0 : index
    %68 = vector.load %arg6[%c0_34, %c0_35] : memref<1x128xf32, #tpu.memory_space<vmem>>, vector<1x128xf32>
    tpu.vector_store %arg6[%c0_34, %c0_35], %67 {strides = array<i32>} : memref<1x128xf32, #tpu.memory_space<vmem>>, vector<1x128xf32>,
    return
  }
  func.func @transform_0(%arg0: i32) -> i32 {
    %c0_i32 = arith.constant 0 : i32
    %c0_i32_0 = arith.constant 0 : i32
    return %c0_i32 : i32
  }
  func.func @transform_1(%arg0: i32) -> i32 {
    %c0_i32 = arith.constant 0 : i32
    %c0_i32_0 = arith.constant 0 : i32
    return %c0_i32 : i32
  }
  func.func @transform_2(%arg0: i32) -> (i32, i32) {
    %c0_i32 = arith.constant 0 : i32
    %c0_i32_0 = arith.constant 0 : i32
    return %c0_i32, %arg0 : i32, i32
  }
  func.func @transform_3(%arg0: i32) -> (i32, i32) {
    %c0_i32 = arith.constant 0 : i32
    %c0_i32_0 = arith.constant 0 : i32
    return %c0_i32, %arg0 : i32, i32
  }
  func.func @transform_4(%arg0: i32) -> (i32, i32) {
    %c0_i32 = arith.constant 0 : i32
    %c0_i32_0 = arith.constant 0 : i32
    return %c0_i32, %arg0 : i32, i32
  }
  func.func @transform_5(%arg0: i32) -> (i32, i32) {
    %c0_i32 = arith.constant 0 : i32
    %c0_i32_0 = arith.constant 0 : i32
    return %c0_i32, %arg0 : i32, i32
  }
}

</mosaic_0001>

<llo_original>
// kernel: model_rnncell_forward.1
$region0: #{model_rnncell_forward.1}
  #allocation0 [shape = 'u32[]', space=smem, size = 0x4, offset = 0x4, fixed_abs, tag = 'smem constant byte address 0x4 - core index']
  #allocation1 [shape = 'u32[72,128]{1,0:T(1,128)}', space=vmem, size = 0x9000, scoped, tag = 'internal scratch']
  #allocation2 [shape = 'f32[1]{0:T(128)S(6)}', space=smem, size = 0x200, scoped, tag = 'scoped memory for model_rnncell_forward.1']
  %s0 = inlined_call_operand.vmem [shape: f32[6], index: 0, kind: input, shape index: {}]
  %s1 = inlined_call_operand.<no memory space> [shape: f32[1], index: 1, kind: input, shape index: {}]
  %s2 = inlined_call_operand.vmem [shape: f32[6,128], index: 2, kind: input, shape index: {}]
  %s3 = inlined_call_operand.vmem [shape: f32[6,128], index: 3, kind: input, shape index: {}]
  %s4 = inlined_call_operand.vmem [shape: f32[1,128], index: 4, kind: output, shape index: {0}]
  %s5 = inlined_call_operand.vmem [shape: f32[1,128], index: 5, kind: output, shape index: {1}]
  %6 = xla_tuple %s4, %s5
  %s7 = sld [smem:[#allocation0]]
  $region38: #{model_rnncell_forward.1} parent=0
    _
  %s9 = ssub.s32 1, %s7
  %s10 = scalar_select 0, %s9, %s7
  %11 = sst [smem:[#allocation2]] %s1
  $region1: #{model_rnncell_forward.1} parent=0
    #allocation3 [shape = 'u8[512]{0}', space=smem, size = 0x200, scoped, tag = 'input window, operand 0, single buffered']
    #allocation4 [shape = 's32[1]{0}', space=sflag, size = 0x4, scoped, tag = 'scoped memory for model_rnncell_forward.1']
    %12 = vsyncpa [#allocation4], 0
    // Predicated region
    $region2: #{model_rnncell_forward.1} parent=1 // pred_check
      _
    $region3: #{model_rnncell_forward.1} parent=1 // pred_check_branch
      %14 = sbr.rel (0) target = $region5
    $region4: #{model_rnncell_forward.1} parent=1 // pred_region
      %16 = vsyncadd [#allocation4], 0
      %s18 = sshll.u32 %s0, 4
      %s19 = int_to_ptr.vmem [resolvable:$true] %s18
      %21 = dma.vmem_to_smem %s19, 16, [#allocation3], [#allocation4]
    $region5: #{model_rnncell_forward.1} parent=1 // pred_fallthru
      _
    // Predicated region
    $region6: #{model_rnncell_forward.1} parent=1 // pred_check
      _
    $region7: #{model_rnncell_forward.1} parent=1 // pred_check_branch
      %23 = sbr.rel (0) target = $region9
    $region8: #{model_rnncell_forward.1} parent=1 // pred_region
      _
    $region9: #{model_rnncell_forward.1} parent=1 // pred_fallthru
      _
    // Predicated region
    $region10: #{model_rnncell_forward.1} parent=1 // pred_check
      _
    $region11: #{model_rnncell_forward.1} parent=1 // pred_check_branch
      %25 = sbr.rel (0) target = $region13
    $region12: #{model_rnncell_forward.1} parent=1 // pred_region
      _
    $region13: #{model_rnncell_forward.1} parent=1 // pred_fallthru
      _
    // Predicated region
    $region14: #{model_rnncell_forward.1} parent=1 // pred_check
      _
    $region15: #{model_rnncell_forward.1} parent=1 // pred_check_branch
      %27 = sbr.rel (0) target = $region17
    $region16: #{model_rnncell_forward.1} parent=1 // pred_region
      _
    $region17: #{model_rnncell_forward.1} parent=1 // pred_fallthru
      _
    // Predicated region
    $region18: #{model_rnncell_forward.1} parent=1 // pred_check
      _
    $region19: #{model_rnncell_forward.1} parent=1 // pred_check_branch
      %29 = sbr.rel (0) target = $region21
    $region20: #{model_rnncell_forward.1} parent=1 // pred_region
      %31 = dma.done [#allocation4], 16
    $region21: #{model_rnncell_forward.1} parent=1 // pred_fallthru
      _
    %32 = sfence
    %s33 = sld [smem:[#allocation2]]
    %v34 = vld [vmem:[%s2] sm:$0x1]
    %s35 = sld [smem:[#allocation3]]
    %v36 = vstv %s35
    %v37 = vmul.f32 %v34, %v36
    %v38 = vld [vmem:[%s2 + $0x1] sm:$0x1]
    %s39 = sld [smem:[#allocation3 + $0x1]]
    %v40 = vstv %s39
    %v41 = vmul.f32 %v38, %v40
    %v42 = vadd.f32 %v37, %v41
    %v43 = vld [vmem:[%s2 + $0x2] sm:$0x1]
    %s44 = sld [smem:[#allocation3 + $0x2]]
    %v45 = vstv %s44
    %v46 = vmul.f32 %v43, %v45
    %v47 = vadd.f32 %v42, %v46
    %v48 = vld [vmem:[%s2 + $0x3] sm:$0x1]
    %s49 = sld [smem:[#allocation3 + $0x3]]
    %v50 = vstv %s49
    %v51 = vmul.f32 %v48, %v50
    %v52 = vadd.f32 %v47, %v51
    %v53 = vld [vmem:[%s2 + $0x4] sm:$0x1]
    %s54 = sld [smem:[#allocation3 + $0x4]]
    %v55 = vstv %s54
    %v56 = vmul.f32 %v53, %v55
    %v57 = vadd.f32 %v52, %v56
    %v58 = vld [vmem:[%s2 + $0x5] sm:$0x1]
    %s59 = sld [smem:[#allocation3 + $0x5]]
    %v60 = vstv %s59
    %v61 = vmul.f32 %v58, %v60
    %v62 = vadd.f32 %v57, %v61
    %v63 = vstv %s33
    %v64 = vadd.f32 %v62, %v63
    %v65 = vmax.f32 %v64, 0.0
    %66 = vst [vmem:[%s4] sm:$0x1] %v65
    %v67 = vld [vmem:[%s3] sm:$0x1]
    %s68 = sld [smem:[#allocation3]]
    %v69 = vstv %s68
    %v70 = vmul.f32 %v67, %v69
    %v71 = vld [vmem:[%s3 + $0x1] sm:$0x1]
    %s72 = sld [smem:[#allocation3 + $0x1]]
    %v73 = vstv %s72
    %v74 = vmul.f32 %v71, %v73
    %v75 = vadd.f32 %v70, %v74
    %v76 = vld [vmem:[%s3 + $0x2] sm:$0x1]
    %s77 = sld [smem:[#allocation3 + $0x2]]
    %v78 = vstv %s77
    %v79 = vmul.f32 %v76, %v78
    %v80 = vadd.f32 %v75, %v79
    %v81 = vld [vmem:[%s3 + $0x3] sm:$0x1]
    %s82 = sld [smem:[#allocation3 + $0x3]]
    %v83 = vstv %s82
    %v84 = vmul.f32 %v81, %v83
    %v85 = vadd.f32 %v80, %v84
    %v86 = vld [vmem:[%s3 + $0x4] sm:$0x1]
    %s87 = sld [smem:[#allocation3 + $0x4]]
    %v88 = vstv %s87
    %v89 = vmul.f32 %v86, %v88
    %v90 = vadd.f32 %v85, %v89
    %v91 = vld [vmem:[%s3 + $0x5] sm:$0x1]
    %s92 = sld [smem:[#allocation3 + $0x5]]
    %v93 = vstv %s92
    %v94 = vmul.f32 %v91, %v93
    %v95 = vadd.f32 %v90, %v94
    %v96 = vadd.f32 %v95, %v63
    %v97 = vmax.f32 %v96, 0.0
    %98 = vst [vmem:[%s5] sm:$0x1] %v97
    // Predicated region
    $region22: #{model_rnncell_forward.1} parent=1 // pred_check
      _
    $region23: #{model_rnncell_forward.1} parent=1 // pred_check_branch
      %100 = sbr.rel (0) target = $region25
    $region24: #{model_rnncell_forward.1} parent=1 // pred_region
      _
    $region25: #{model_rnncell_forward.1} parent=1 // pred_fallthru
      _
    // Predicated region
    $region26: #{model_rnncell_forward.1} parent=1 // pred_check
      _
    $region27: #{model_rnncell_forward.1} parent=1 // pred_check_branch
      %102 = sbr.rel (0) target = $region29
    $region28: #{model_rnncell_forward.1} parent=1 // pred_region
      _
    $region29: #{model_rnncell_forward.1} parent=1 // pred_fallthru
      _
    // Predicated region
    $region30: #{model_rnncell_forward.1} parent=1 // pred_check
      _
    $region31: #{model_rnncell_forward.1} parent=1 // pred_check_branch
      %104 = sbr.rel (0) target = $region33
    $region32: #{model_rnncell_forward.1} parent=1 // pred_region
      _
    $region33: #{model_rnncell_forward.1} parent=1 // pred_fallthru
      _
    // Predicated region
    $region34: #{model_rnncell_forward.1} parent=1 // pred_check
      _
    $region35: #{model_rnncell_forward.1} parent=1 // pred_check_branch
      %106 = sbr.rel (0) target = $region37
    $region36: #{model_rnncell_forward.1} parent=1 // pred_region
      _
    $region37: #{model_rnncell_forward.1} parent=1 // pred_fallthru
      _
    %107 = vsyncpa [#allocation4], 1

</llo_original>
